<compile_context>
chip_gen: v5e
topology: v5e:2x2
jax: 0.10.0
libtpu: 0.0.40
codegen_flags: <defaults>
</compile_context>

<pallas_src>
import jax
import jax.numpy as jnp
from jax.experimental import pallas as pl
from jax.experimental.pallas import tpu as pltpu


def _pick_tile(n, unit, max_tile):
    """Largest tile <= max_tile that is a multiple of `unit` and divides n,
    or n itself (a full-extent block is always legal)."""
    if n <= max_tile:
        return n
    t = (max_tile // unit) * unit
    while t >= unit:
        if n % t == 0:
            return t
        t -= unit
    return n


def _stats_kernel(x_ref, m_ref, sxm_ref, sx2m_ref, sm_ref):
    # x_ref, m_ref: (tr, tl) tile of the (B*C, H*W) flattened inputs.
    # Outputs: (tr, 1) per-row accumulators, resident across the lane-tile
    # (reduction) grid axis.
    @pl.when(pl.program_id(1) == 0)
    def _():
        sxm_ref[...] = jnp.zeros_like(sxm_ref)
        sx2m_ref[...] = jnp.zeros_like(sx2m_ref)
        sm_ref[...] = jnp.zeros_like(sm_ref)

    x = x_ref[...].astype(jnp.float32)   # upcast inside the kernel (v5e)
    m = m_ref[...].astype(jnp.float32)
    xm = x * m
    sxm_ref[...] += jnp.sum(xm, axis=-1, keepdims=True)
    sx2m_ref[...] += jnp.sum(xm * x, axis=-1, keepdims=True)
    sm_ref[...] += jnp.sum(m, axis=-1, keepdims=True)


def _normalize_kernel(x_ref, scale_ref, shift_ref, o_ref):
    # Pure lane-dense FMA: out = x * scale + shift.
    x = x_ref[...].astype(jnp.float32)
    o_ref[...] = (x * scale_ref[...] + shift_ref[...]).astype(o_ref.dtype)


def mask_bn_forward(x, mask, weight, bias, running_mean, running_var,
                    *, eps=1e-5, momentum=0.1):
    """Training-mode forward of maskBN.

    Returns (out, new_running_mean, new_running_var); the latter two replace
    the PyTorch in-place buffer mutation.
    """
    B, C, H, W = x.shape
    assert W == C, "PyTorch maskBN's NCHW broadcast requires W == num_features"
    L = H * W
    R = B * C

    # Free reshapes of contiguous NCHW tensors — no transpose, no extra HBM copy.
    x_rows = x.reshape(R, L)
    m_rows = mask.reshape(R, L)

    # ---- Pass 1: one-pass per-(b,c) masked sums, streamed over H*W tiles. ----
    tr = _pick_tile(R, 8, 256)
    tl = _pick_tile(L, 128, 2048)       # block <= 2 MiB/input, fits v7x budget
    grid = (R // tr, L // tl)

    row_spec = pl.BlockSpec((tr, tl), lambda i, j: (i, j))
    acc_spec = pl.BlockSpec((tr, 1), lambda i, j: (i, 0))

    sxm, sx2m, sm = pl.pallas_call(
        _stats_kernel,
        out_shape=(jax.ShapeDtypeStruct((R, 1), jnp.float32),
                   jax.ShapeDtypeStruct((R, 1), jnp.float32),
                   jax.ShapeDtypeStruct((R, 1), jnp.float32)),
        grid=grid,
        in_specs=[row_spec, row_spec],
        out_specs=(acc_spec, acc_spec, acc_spec),
        compiler_params=pltpu.CompilerParams(
            dimension_semantics=("parallel", "arbitrary"),
            vmem_limit_bytes=32 * 1024 * 1024),
    )(x_rows, m_rows)

    sxm = sxm.reshape(B, C)
    sx2m = sx2m.reshape(B, C)
    sm = sm.reshape(B, C)

    # ---- Tiny (C,)-sized combine in plain JAX. ----
    denom = jnp.sum(sm, axis=1, keepdims=True) + 1.0                    # (B, 1)
    mean = jnp.mean(sxm / denom, axis=0)                                # (C,)
    var = jnp.mean(
        (sx2m - 2.0 * mean * sxm + (mean * mean) * sm) / denom, axis=0)  # (C,)

    scale = weight.astype(jnp.float32) * jax.lax.rsqrt(var + eps)        # (C,)
    shift = bias.astype(jnp.float32) - mean * scale                      # (C,)

    # The NCHW broadcast applies stats along the last (W) axis.  In the
    # flattened (B*C, H*W) row, column l = h*W + w picks scale[w], i.e. the
    # (C,) vector tiled H times along the lane axis -> lane-dense (1, H*W).
    scale_row = jnp.tile(scale, H).reshape(1, L)
    shift_row = jnp.tile(shift, H).reshape(1, L)

    # ---- Pass 2: lane-dense normalize out = x*scale + shift. ----
    tr2 = _pick_tile(R, 8, 512)
    tl2 = _pick_tile(L, 128, 4096)
    grid2 = (R // tr2, L // tl2)

    out = pl.pallas_call(
        _normalize_kernel,
        out_shape=jax.ShapeDtypeStruct((R, L), x.dtype),
        grid=grid2,
        in_specs=[pl.BlockSpec((tr2, tl2), lambda i, j: (i, j)),
                  pl.BlockSpec((1, tl2), lambda i, j: (0, j)),
                  pl.BlockSpec((1, tl2), lambda i, j: (0, j))],
        out_specs=pl.BlockSpec((tr2, tl2), lambda i, j: (i, j)),
        compiler_params=pltpu.CompilerParams(
            dimension_semantics=("parallel", "parallel"),
            vmem_limit_bytes=32 * 1024 * 1024),
    )(x_rows, scale_row, shift_row).reshape(B, C, H, W)

    # Running-stat update exactly as written in the module (eaf = momentum).
    # TODO(synk): the module's `running*eaf + (1-eaf)*batch` convention differs
    # from standard PyTorch BN; num_batches_tracked and the eval-mode branch
    # are not exercised here.
    eaf = momentum
    new_running_mean = running_mean * eaf + (1.0 - eaf) * mean
    new_running_var = running_var * eaf + (1.0 - eaf) * var
    return out, new_running_mean, new_running_var


def _ref_forward(x, mask, weight, bias, eps=1e-5):
    """Plain-JAX transcription of the PyTorch forward (training path)."""
    b, c, h, w = x.shape
    mask_mean = jnp.sum(mask.reshape(b, -1), axis=1) + 1.0
    xi = jnp.transpose(x, (0, 2, 3, 1)).reshape(b, -1, c)
    mi = jnp.transpose(mask, (0, 2, 3, 1)).reshape(b, -1, c)
    mean = jnp.mean(jnp.sum(xi * mi, axis=1) / mask_mean[:, None], axis=0)
    sq = (xi - mean[None, None, :]) ** 2
    var = jnp.mean(jnp.sum(sq * mi, axis=1) / mask_mean[:, None], axis=0)
    # NOTE: (b,c,h,w) op (c,) broadcasts along the last (W) axis, as in torch.
    return (x - mean) / jnp.sqrt(var + eps) * weight + bias


if __name__ == "__main__":
    key = jax.random.PRNGKey(0)
    kx, km, kw = jax.random.split(key, 3)

    # num_features = 16; W must equal num_features for the module's broadcast.
    # H*W = 128 so the flattened rows are exactly one lane-width wide.
    B, C, H, W = 2, 16, 8, 16
    x = jax.random.normal(kx, (B, C, H, W), dtype=jnp.float32)
    mask = jax.random.bernoulli(km, p=0.7, shape=(B, C, H, W)).astype(jnp.float32)

    # reset_parameters(): weight ~ uniform_(), bias = 0; buffers: mean 0, var 1.
    weight = jax.random.uniform(kw, (C,), dtype=jnp.float32)
    bias = jnp.zeros((C,), dtype=jnp.float32)
    running_mean = jnp.zeros((C,), dtype=jnp.float32)
    running_var = jnp.ones((C,), dtype=jnp.float32)

    fwd = jax.jit(mask_bn_forward)
    out, rm, rv = fwd(x, mask, weight, bias, running_mean, running_var)
    jax.block_until_ready(out)

    ref = _ref_forward(x, mask, weight, bias)
    max_err = float(jnp.max(jnp.abs(out - ref)))
    assert jnp.allclose(out, ref, atol=1e-4, rtol=1e-4), f"mismatch, max_err={max_err}"

    print("KERNEL_OK")
</pallas_src>

<mosaic_0001>
module attributes {stable_mosaic.version = 11 : i64} {
  func.func @_stats_kernel(%arg0: i32, %arg1: i32, %arg2: memref<32x128xf32, #tpu.memory_space<vmem>>, %arg3: memref<32x128xf32, #tpu.memory_space<vmem>>, %arg4: memref<32x1xf32, #tpu.memory_space<vmem>>, %arg5: memref<32x1xf32, #tpu.memory_space<vmem>>, %arg6: memref<32x1xf32, #tpu.memory_space<vmem>>) attributes {dimension_semantics = [#tpu.dimension_semantics<parallel>, #tpu.dimension_semantics<arbitrary>], iteration_bounds = array<i64: 1, 1>, scalar_prefetch = 0 : i64, scratch_operands = 0 : i64, tpu.core_type = #tpu.core_type<tc>, window_params = [{transform_indices = @transform_0, window_bounds = array<i64: 32, 128>}, {transform_indices = @transform_1, window_bounds = array<i64: 32, 128>}, {transform_indices = @transform_2, window_bounds = array<i64: 32, 1>}, {transform_indices = @transform_3, window_bounds = array<i64: 32, 1>}, {transform_indices = @transform_4, window_bounds = array<i64: 32, 1>}]} {
    %c0_i32 = arith.constant 0 : i32
    %0 = arith.cmpi eq, %arg1, %c0_i32 : i32
    %1 = arith.extui %0 : i1 to i32
    %c0_i32_0 = arith.constant 0 : i32
    %2 = arith.cmpi ne, %1, %c0_i32_0 : i32
    scf.if %2 {
      %cst_18 = arith.constant 0.000000e+00 : f32
      %22 = vector.broadcast %cst_18 : f32 to vector<32x1xf32>
      %c0_19 = arith.constant 0 : index
      %c0_20 = arith.constant 0 : index
      %23 = vector.load %arg4[%c0_19, %c0_20] : memref<32x1xf32, #tpu.memory_space<vmem>>, vector<32x1xf32>
      tpu.vector_store %arg4[%c0_19, %c0_20], %22 {strides = array<i32>} : memref<32x1xf32, #tpu.memory_space<vmem>>, vector<32x1xf32>,
      %cst_21 = arith.constant 0.000000e+00 : f32
      %24 = vector.broadcast %cst_21 : f32 to vector<32x1xf32>
      %c0_22 = arith.constant 0 : index
      %c0_23 = arith.constant 0 : index
      %25 = vector.load %arg5[%c0_22, %c0_23] : memref<32x1xf32, #tpu.memory_space<vmem>>, vector<32x1xf32>
      tpu.vector_store %arg5[%c0_22, %c0_23], %24 {strides = array<i32>} : memref<32x1xf32, #tpu.memory_space<vmem>>, vector<32x1xf32>,
      %cst_24 = arith.constant 0.000000e+00 : f32
      %26 = vector.broadcast %cst_24 : f32 to vector<32x1xf32>
      %c0_25 = arith.constant 0 : index
      %c0_26 = arith.constant 0 : index
      %27 = vector.load %arg6[%c0_25, %c0_26] : memref<32x1xf32, #tpu.memory_space<vmem>>, vector<32x1xf32>
      tpu.vector_store %arg6[%c0_25, %c0_26], %26 {strides = array<i32>} : memref<32x1xf32, #tpu.memory_space<vmem>>, vector<32x1xf32>,
    } else {
    }
    %c0 = arith.constant 0 : index
    %c0_1 = arith.constant 0 : index
    %3 = vector.load %arg2[%c0, %c0_1] : memref<32x128xf32, #tpu.memory_space<vmem>>, vector<32x128xf32>
    %c0_2 = arith.constant 0 : index
    %c0_3 = arith.constant 0 : index
    %4 = vector.load %arg3[%c0_2, %c0_3] : memref<32x128xf32, #tpu.memory_space<vmem>>, vector<32x128xf32>
    %5 = arith.mulf %3, %4 : vector<32x128xf32>
    %c0_4 = arith.constant 0 : index
    %c0_5 = arith.constant 0 : index
    %6 = vector.load %arg4[%c0_4, %c0_5] : memref<32x1xf32, #tpu.memory_space<vmem>>, vector<32x1xf32>
    %cst = arith.constant dense<0.000000e+00> : vector<32xf32>
    %7 = vector.multi_reduction <add>, %5, %cst [1] : vector<32x128xf32> to vector<32xf32>
    %8 = vector.shape_cast %7 : vector<32xf32> to vector<32x1xf32>
    %9 = arith.addf %6, %8 : vector<32x1xf32>
    %c0_6 = arith.constant 0 : index
    %c0_7 = arith.constant 0 : index
    %10 = vector.load %arg4[%c0_6, %c0_7] : memref<32x1xf32, #tpu.memory_space<vmem>>, vector<32x1xf32>
    tpu.vector_store %arg4[%c0_6, %c0_7], %9 {strides = array<i32>} : memref<32x1xf32, #tpu.memory_space<vmem>>, vector<32x1xf32>,
    %c0_8 = arith.constant 0 : index
    %c0_9 = arith.constant 0 : index
    %11 = vector.load %arg5[%c0_8, %c0_9] : memref<32x1xf32, #tpu.memory_space<vmem>>, vector<32x1xf32>
    %12 = arith.mulf %5, %3 : vector<32x128xf32>
    %cst_10 = arith.constant dense<0.000000e+00> : vector<32xf32>
    %13 = vector.multi_reduction <add>, %12, %cst_10 [1] : vector<32x128xf32> to vector<32xf32>
    %14 = vector.shape_cast %13 : vector<32xf32> to vector<32x1xf32>
    %15 = arith.addf %11, %14 : vector<32x1xf32>
    %c0_11 = arith.constant 0 : index
    %c0_12 = arith.constant 0 : index
    %16 = vector.load %arg5[%c0_11, %c0_12] : memref<32x1xf32, #tpu.memory_space<vmem>>, vector<32x1xf32>
    tpu.vector_store %arg5[%c0_11, %c0_12], %15 {strides = array<i32>} : memref<32x1xf32, #tpu.memory_space<vmem>>, vector<32x1xf32>,
    %c0_13 = arith.constant 0 : index
    %c0_14 = arith.constant 0 : index
    %17 = vector.load %arg6[%c0_13, %c0_14] : memref<32x1xf32, #tpu.memory_space<vmem>>, vector<32x1xf32>
    %cst_15 = arith.constant dense<0.000000e+00> : vector<32xf32>
    %18 = vector.multi_reduction <add>, %4, %cst_15 [1] : vector<32x128xf32> to vector<32xf32>
    %19 = vector.shape_cast %18 : vector<32xf32> to vector<32x1xf32>
    %20 = arith.addf %17, %19 : vector<32x1xf32>
    %c0_16 = arith.constant 0 : index
    %c0_17 = arith.constant 0 : index
    %21 = vector.load %arg6[%c0_16, %c0_17] : memref<32x1xf32, #tpu.memory_space<vmem>>, vector<32x1xf32>
    tpu.vector_store %arg6[%c0_16, %c0_17], %20 {strides = array<i32>} : memref<32x1xf32, #tpu.memory_space<vmem>>, vector<32x1xf32>,
    return
  }
  func.func @transform_0(%arg0: i32, %arg1: i32) -> (i32, i32) {
    %c0_i32 = arith.constant 0 : i32
    return %arg0, %arg1 : i32, i32
  }
  func.func @transform_1(%arg0: i32, %arg1: i32) -> (i32, i32) {
    %c0_i32 = arith.constant 0 : i32
    return %arg0, %arg1 : i32, i32
  }
  func.func @transform_2(%arg0: i32, %arg1: i32) -> (i32, i32) {
    %c0_i32 = arith.constant 0 : i32
    %c0_i32_0 = arith.constant 0 : i32
    return %arg0, %c0_i32 : i32, i32
  }
  func.func @transform_3(%arg0: i32, %arg1: i32) -> (i32, i32) {
    %c0_i32 = arith.constant 0 : i32
    %c0_i32_0 = arith.constant 0 : i32
    return %arg0, %c0_i32 : i32, i32
  }
  func.func @transform_4(%arg0: i32, %arg1: i32) -> (i32, i32) {
    %c0_i32 = arith.constant 0 : i32
    %c0_i32_0 = arith.constant 0 : i32
    return %arg0, %c0_i32 : i32, i32
  }
}

module attributes {stable_mosaic.version = 11 : i64} {
  func.func @_normalize_kernel(%arg0: i32, %arg1: i32, %arg2: memref<32x128xf32, #tpu.memory_space<vmem>>, %arg3: memref<1x128xf32, #tpu.memory_space<vmem>>, %arg4: memref<1x128xf32, #tpu.memory_space<vmem>>, %arg5: memref<32x128xf32, #tpu.memory_space<vmem>>) attributes {dimension_semantics = [#tpu.dimension_semantics<parallel>, #tpu.dimension_semantics<parallel>], iteration_bounds = array<i64: 1, 1>, scalar_prefetch = 0 : i64, scratch_operands = 0 : i64, tpu.core_type = #tpu.core_type<tc>, window_params = [{transform_indices = @transform_0, window_bounds = array<i64: 32, 128>}, {transform_indices = @transform_1, window_bounds = array<i64: 1, 128>}, {transform_indices = @transform_2, window_bounds = array<i64: 1, 128>}, {transform_indices = @transform_3, window_bounds = array<i64: 32, 128>}]} {
    %c0 = arith.constant 0 : index
    %c0_0 = arith.constant 0 : index
    %0 = vector.load %arg2[%c0, %c0_0] : memref<32x128xf32, #tpu.memory_space<vmem>>, vector<32x128xf32>
    %c0_1 = arith.constant 0 : index
    %c0_2 = arith.constant 0 : index
    %1 = vector.load %arg3[%c0_1, %c0_2] : memref<1x128xf32, #tpu.memory_space<vmem>>, vector<1x128xf32>
    %2 = vector.broadcast %1 : vector<1x128xf32> to vector<32x128xf32>
    %3 = arith.mulf %0, %2 : vector<32x128xf32>
    %c0_3 = arith.constant 0 : index
    %c0_4 = arith.constant 0 : index
    %4 = vector.load %arg4[%c0_3, %c0_4] : memref<1x128xf32, #tpu.memory_space<vmem>>, vector<1x128xf32>
    %5 = vector.broadcast %4 : vector<1x128xf32> to vector<32x128xf32>
    %6 = arith.addf %3, %5 : vector<32x128xf32>
    %c0_5 = arith.constant 0 : index
    %c0_6 = arith.constant 0 : index
    %7 = vector.load %arg5[%c0_5, %c0_6] : memref<32x128xf32, #tpu.memory_space<vmem>>, vector<32x128xf32>
    tpu.vector_store %arg5[%c0_5, %c0_6], %6 {strides = array<i32>} : memref<32x128xf32, #tpu.memory_space<vmem>>, vector<32x128xf32>,
    return
  }
  func.func @transform_0(%arg0: i32, %arg1: i32) -> (i32, i32) {
    %c0_i32 = arith.constant 0 : i32
    return %arg0, %arg1 : i32, i32
  }
  func.func @transform_1(%arg0: i32, %arg1: i32) -> (i32, i32) {
    %c0_i32 = arith.constant 0 : i32
    %c0_i32_0 = arith.constant 0 : i32
    return %c0_i32, %arg1 : i32, i32
  }
  func.func @transform_2(%arg0: i32, %arg1: i32) -> (i32, i32) {
    %c0_i32 = arith.constant 0 : i32
    %c0_i32_0 = arith.constant 0 : i32
    return %c0_i32, %arg1 : i32, i32
  }
  func.func @transform_3(%arg0: i32, %arg1: i32) -> (i32, i32) {
    %c0_i32 = arith.constant 0 : i32
    return %arg0, %arg1 : i32, i32
  }
}

</mosaic_0001>

<llo_original>
// kernel: tile.18
$region0: #{tile.18}
  #allocation0 [shape = 's32[1]{0}', space=sflag, size = 0x4, scoped, tag = 'scoped memory for tile.18']
  %s0 = inlined_call_operand.vmem [shape: f32[16], index: 0, kind: input, shape index: {}]
  %s1 = inlined_call_operand.vmem [shape: f32[8,16], index: 1, kind: output, shape index: {}]
  // Predicated region
  $region2: #{tile.18} parent=0 // pred_check
    _
  $region3: #{tile.18} parent=0 // pred_check_branch
    %3 = sbr.rel (0) target = $region5
  $region4: #{tile.18} parent=0 // pred_region
    _
  $region5: #{tile.18} parent=0 // pred_fallthru
    _
  %v4 = vld [vmem:[%s0] ss:$0 sm:$0xff]
  %5 = vst [vmem:[%s1] sm:$0xff] %v4

// kernel: tile.19
$region0: #{tile.19}
  %s0 = inlined_call_operand.vmem [shape: f32[8,16], index: 0, kind: input, shape index: {}]
  %s1 = inlined_call_operand.vmem [shape: f32[1,128], index: 1, kind: output, shape index: {}]
  $region1: #{tile.19} parent=0
    #allocation0 [shape = 'u8[4096]{0}', space=vmem, size = 0x1000, scoped, tag = 'scoped mem for output reshape']
    %v2 = vld [vmem:[%s0] sm:$0x1]
    %vm3 = vcmask 130048
    %4 = vst.msk [vmem:[#allocation0] sm:$0x1] %vm3, %v2
    %s5 = scalar_lea.vmem %s0, 7
    %v6 = vld [vmem:[%s5] sm:$0x1]
    %7 = vrot.lane.b32.xlu0 %v6, 112
    %v8 = vpop.permute.xlu0 %7
    %vm9 = vcmask 1048448
    %10 = vst.msk [vmem:[#allocation0] sm:$0x1] %vm9, %v8
    %s11 = scalar_lea.vmem %s0, 6
    %v12 = vld [vmem:[%s11] sm:$0x1]
    %13 = vrot.lane.b32.xlu0 %v12, 96
    %v14 = vpop.permute.xlu0 %13
    %vm15 = vcmask 917248
    %16 = vst.msk [vmem:[#allocation0] sm:$0x1] %vm15, %v14
    %s17 = scalar_lea.vmem %s0, 5
    %v18 = vld [vmem:[%s17] sm:$0x1]
    %19 = vrot.lane.b32.xlu0 %v18, 80
    %v20 = vpop.permute.xlu0 %19
    %vm21 = vcmask 786048
    %22 = vst.msk [vmem:[#allocation0] sm:$0x1] %vm21, %v20
    %s23 = scalar_lea.vmem %s0, 4
    %v24 = vld [vmem:[%s23] sm:$0x1]
    %25 = vrot.lane.b32.xlu0 %v24, 64
    %v26 = vpop.permute.xlu0 %25
    %vm27 = vcmask 654848
    %28 = vst.msk [vmem:[#allocation0] sm:$0x1] %vm27, %v26
    %s29 = scalar_lea.vmem %s0, 3
    %v30 = vld [vmem:[%s29] sm:$0x1]
    %31 = vrot.lane.b32.xlu0 %v30, 48
    %v32 = vpop.permute.xlu0 %31
    %vm33 = vcmask 523648
    %34 = vst.msk [vmem:[#allocation0] sm:$0x1] %vm33, %v32
    %s35 = scalar_lea.vmem %s0, 2
    %v36 = vld [vmem:[%s35] sm:$0x1]
    %37 = vrot.lane.b32.xlu0 %v36, 32
    %v38 = vpop.permute.xlu0 %37
    %vm39 = vcmask 392448
    %40 = vst.msk [vmem:[#allocation0] sm:$0x1] %vm39, %v38
    %s41 = scalar_lea.vmem %s0, 1
    %v42 = vld [vmem:[%s41] sm:$0x1]
    %43 = vrot.lane.b32.xlu0 %v42, 16
    %v44 = vpop.permute.xlu0 %43
    %vm45 = vcmask 261248
    %46 = vst.msk [vmem:[#allocation0] sm:$0x1] %vm45, %v44
    %s48 = ssub.s32 2, 1
    %v49 = vld [vmem:[#allocation0] sm:%s48]
    %s51 = ssub.s32 2, 1
    %52 = vst [vmem:[%s1] sm:%s51] %v49

// kernel: mask_bn_forward.2
$region0: #{mask_bn_forward.2}
  #allocation0 [shape = 'u32[]', space=smem, size = 0x4, offset = 0x4, fixed_abs, tag = 'smem constant byte address 0x4 - core index']
  #allocation1 [shape = 'u32[72,128]{1,0:T(1,128)}', space=vmem, size = 0x9000, scoped, tag = 'internal scratch']
  %s0 = inlined_call_operand.vmem [shape: f32[32,128], index: 0, kind: input, shape index: {}]
  %s1 = inlined_call_operand.vmem [shape: f32[32,128], index: 1, kind: input, shape index: {}]
  %s2 = inlined_call_operand.vmem [shape: f32[32,1], index: 2, kind: output, shape index: {0}]
  %s3 = inlined_call_operand.vmem [shape: f32[32,1], index: 3, kind: output, shape index: {1}]
  %s4 = inlined_call_operand.vmem [shape: f32[32,1], index: 4, kind: output, shape index: {2}]
  %5 = xla_tuple %s2, %s3, %s4
  %s6 = sld [smem:[#allocation0]]
  $region38: #{mask_bn_forward.2} parent=0
    _
  %s8 = ssub.s32 1, %s6
  %s9 = scalar_select 0, %s8, %s6
  // Predicated region
  $region2: #{mask_bn_forward.2} parent=0 // pred_check
    _
  $region3: #{mask_bn_forward.2} parent=0 // pred_check_branch
    %11 = sbr.rel (0) target = $region5
  $region4: #{mask_bn_forward.2} parent=0 // pred_region
    _
  $region5: #{mask_bn_forward.2} parent=0 // pred_fallthru
    _
  // Predicated region
  $region6: #{mask_bn_forward.2} parent=0 // pred_check
    _
  $region7: #{mask_bn_forward.2} parent=0 // pred_check_branch
    %13 = sbr.rel (0) target = $region9
  $region8: #{mask_bn_forward.2} parent=0 // pred_region
    _
  $region9: #{mask_bn_forward.2} parent=0 // pred_fallthru
    _
  %p14 = scmp.eq.s32.totalorder 0, 0
  // Predicated region
  $region10: #{mask_bn_forward.2} parent=0 // pred_check
    %p15 = pneg %p14
  $region11: #{mask_bn_forward.2} parent=0 // pred_check_branch
    %17 = sbr.rel (%p15) target = $region13
  $region12: #{mask_bn_forward.2} parent=0 // pred_region
    %vm18 = vcmask 7168
    %19 = vst.msk [vmem:[%s2] sm:$0xff] %vm18, 0.0
    %20 = vst.msk [vmem:[%s2 + $0x8] sm:$0xff] %vm18, 0.0
    %21 = vst.msk [vmem:[%s2 + $0x10] sm:$0xff] %vm18, 0.0
    %22 = vst.msk [vmem:[%s2 + $0x18] sm:$0xff] %vm18, 0.0
    %23 = vst.msk [vmem:[%s3] sm:$0xff] %vm18, 0.0
    %24 = vst.msk [vmem:[%s3 + $0x8] sm:$0xff] %vm18, 0.0
    %25 = vst.msk [vmem:[%s3 + $0x10] sm:$0xff] %vm18, 0.0
    %26 = vst.msk [vmem:[%s3 + $0x18] sm:$0xff] %vm18, 0.0
    %27 = vst.msk [vmem:[%s4] sm:$0xff] %vm18, 0.0
    %28 = vst.msk [vmem:[%s4 + $0x8] sm:$0xff] %vm18, 0.0
    %29 = vst.msk [vmem:[%s4 + $0x10] sm:$0xff] %vm18, 0.0
    %30 = vst.msk [vmem:[%s4 + $0x18] sm:$0xff] %vm18, 0.0
  $region13: #{mask_bn_forward.2} parent=0 // pred_fallthru
    _
  %v31 = vld [vmem:[%s0] sm:$0xff]
  %v32 = vld [vmem:[%s0 + $0x8] sm:$0xff]
  %v33 = vld [vmem:[%s0 + $0x10] sm:$0xff]
  %v34 = vld [vmem:[%s0 + $0x18] sm:$0xff]
  %v35 = vld [vmem:[%s1] sm:$0xff]
  %v36 = vld [vmem:[%s1 + $0x8] sm:$0xff]
  %v37 = vld [vmem:[%s1 + $0x10] sm:$0xff]
  %v38 = vld [vmem:[%s1 + $0x18] sm:$0xff]
  %v39 = vmul.f32 %v31, %v35
  %v40 = vmul.f32 %v32, %v36
  %v41 = vmul.f32 %v33, %v37
  %v42 = vmul.f32 %v34, %v38
  %v43 = vld [vmem:[%s2] sm:$0xff]
  %v44 = vld [vmem:[%s2 + $0x8] sm:$0xff]
  %v45 = vld [vmem:[%s2 + $0x10] sm:$0xff]
  %v46 = vld [vmem:[%s2 + $0x18] sm:$0xff]
  %47 = vadd.xlane.f32.xlu0 %v39
  %v48 = vpop.xlane.xlu0 %47
  %49 = vadd.xlane.f32.xlu0 %v40
  %v50 = vpop.xlane.xlu0 %49
  %51 = vadd.xlane.f32.xlu0 %v41
  %v52 = vpop.xlane.xlu0 %51
  %53 = vadd.xlane.f32.xlu0 %v42
  %v54 = vpop.xlane.xlu0 %53
  %v55 = vadd.f32 %v43, %v48
  %v56 = vadd.f32 %v44, %v50
  %v57 = vadd.f32 %v45, %v52
  %v58 = vadd.f32 %v46, %v54
  %vm59 = vcmask 7168
  %60 = vst.msk [vmem:[%s2] sm:$0xff] %vm59, %v55
  %61 = vst.msk [vmem:[%s2 + $0x8] sm:$0xff] %vm59, %v56
  %62 = vst.msk [vmem:[%s2 + $0x10] sm:$0xff] %vm59, %v57
  %63 = vst.msk [vmem:[%s2 + $0x18] sm:$0xff] %vm59, %v58
  %v64 = vld [vmem:[%s3] sm:$0xff]
  %v65 = vld [vmem:[%s3 + $0x8] sm:$0xff]
  %v66 = vld [vmem:[%s3 + $0x10] sm:$0xff]
  %v67 = vld [vmem:[%s3 + $0x18] sm:$0xff]
  %v68 = vmul.f32 %v39, %v31
  %v69 = vmul.f32 %v40, %v32
  %v70 = vmul.f32 %v41, %v33
  %v71 = vmul.f32 %v42, %v34
  %72 = vadd.xlane.f32.xlu0 %v68
  %v73 = vpop.xlane.xlu0 %72
  %74 = vadd.xlane.f32.xlu0 %v69
  %v75 = vpop.xlane.xlu0 %74
  %76 = vadd.xlane.f32.xlu0 %v70
  %v77 = vpop.xlane.xlu0 %76
  %78 = vadd.xlane.f32.xlu0 %v71
  %v79 = vpop.xlane.xlu0 %78
  %v80 = vadd.f32 %v64, %v73
  %v81 = vadd.f32 %v65, %v75
  %v82 = vadd.f32 %v66, %v77
  %v83 = vadd.f32 %v67, %v79
  %84 = vst.msk [vmem:[%s3] sm:$0xff] %vm59, %v80
  %85 = vst.msk [vmem:[%s3 + $0x8] sm:$0xff] %vm59, %v81
  %86 = vst.msk [vmem:[%s3 + $0x10] sm:$0xff] %vm59, %v82
  %87 = vst.msk [vmem:[%s3 + $0x18] sm:$0xff] %vm59, %v83
  %v88 = vld [vmem:[%s4] sm:$0xff]
  %v89 = vld [vmem:[%s4 + $0x8] sm:$0xff]
  %v90 = vld [vmem:[%s4 + $0x10] sm:$0xff]
  %v91 = vld [vmem:[%s4 + $0x18] sm:$0xff]
  %92 = vadd.xlane.f32.xlu0 %v35
  %v93 = vpop.xlane.xlu0 %92
  %94 = vadd.xlane.f32.xlu0 %v36
  %v95 = vpop.xlane.xlu0 %94
  %96 = vadd.xlane.f32.xlu0 %v37
  %v97 = vpop.xlane.xlu0 %96
  %98 = vadd.xlane.f32.xlu0 %v38
  %v99 = vpop.xlane.xlu0 %98
  %v100 = vadd.f32 %v88, %v93
  %v101 = vadd.f32 %v89, %v95
  %v102 = vadd.f32 %v90, %v97
  %v103 = vadd.f32 %v91, %v99
  %104 = vst.msk [vmem:[%s4] sm:$0xff] %vm59, %v100
  %105 = vst.msk [vmem:[%s4 + $0x8] sm:$0xff] %vm59, %v101
  %106 = vst.msk [vmem:[%s4 + $0x10] sm:$0xff] %vm59, %v102
  %107 = vst.msk [vmem:[%s4 + $0x18] sm:$0xff] %vm59, %v103
  // Predicated region
  $region14: #{mask_bn_forward.2} parent=0 // pred_check
    _
  $region15: #{mask_bn_forward.2} parent=0 // pred_check_branch
    %109 = sbr.rel (0) target = $region17
  $region16: #{mask_bn_forward.2} parent=0 // pred_region
    _
  $region17: #{mask_bn_forward.2} parent=0 // pred_fallthru
    _
  // Predicated region
  $region18: #{mask_bn_forward.2} parent=0 // pred_check
    _
  $region19: #{mask_bn_forward.2} parent=0 // pred_check_branch
    %111 = sbr.rel (0) target = $region21
  $region20: #{mask_bn_forward.2} parent=0 // pred_region
    _
  $region21: #{mask_bn_forward.2} parent=0 // pred_fallthru
    _
  // Predicated region
  $region22: #{mask_bn_forward.2} parent=0 // pred_check
    _
  $region23: #{mask_bn_forward.2} parent=0 // pred_check_branch
    %113 = sbr.rel (0) target = $region25
  $region24: #{mask_bn_forward.2} parent=0 // pred_region
    _
  $region25: #{mask_bn_forward.2} parent=0 // pred_fallthru
    _
  // Predicated region
  $region26: #{mask_bn_forward.2} parent=0 // pred_check
    _
  $region27: #{mask_bn_forward.2} parent=0 // pred_check_branch
    %115 = sbr.rel (0) target = $region29
  $region28: #{mask_bn_forward.2} parent=0 // pred_region
    _
  $region29: #{mask_bn_forward.2} parent=0 // pred_fallthru
    _
  // Predicated region
  $region30: #{mask_bn_forward.2} parent=0 // pred_check
    _
  $region31: #{mask_bn_forward.2} parent=0 // pred_check_branch
    %117 = sbr.rel (0) target = $region33
  $region32: #{mask_bn_forward.2} parent=0 // pred_region
    _
  $region33: #{mask_bn_forward.2} parent=0 // pred_fallthru
    _
  // Predicated region
  $region34: #{mask_bn_forward.2} parent=0 // pred_check
    _
  $region35: #{mask_bn_forward.2} parent=0 // pred_check_branch
    %119 = sbr.rel (0) target = $region37
  $region36: #{mask_bn_forward.2} parent=0 // pred_region
    _
  $region37: #{mask_bn_forward.2} parent=0 // pred_fallthru
    _

// kernel: mask_bn_forward.3
$region0: #{mask_bn_forward.3}
  #allocation0 [shape = 'u32[]', space=smem, size = 0x4, offset = 0x4, fixed_abs, tag = 'smem constant byte address 0x4 - core index']
  #allocation1 [shape = 'u32[72,128]{1,0:T(1,128)}', space=vmem, size = 0x9000, scoped, tag = 'internal scratch']
  %s0 = inlined_call_operand.vmem [shape: f32[32,128], index: 0, kind: input, shape index: {}]
  %s1 = inlined_call_operand.vmem [shape: f32[1,128], index: 1, kind: input, shape index: {}]
  %s2 = inlined_call_operand.vmem [shape: f32[1,128], index: 2, kind: input, shape index: {}]
  %s3 = inlined_call_operand.vmem [shape: f32[32,128], index: 3, kind: output, shape index: {}]
  %s4 = sld [smem:[#allocation0]]
  $region22: #{mask_bn_forward.3} parent=0
    _
  %s6 = ssub.s32 1, %s4
  %s7 = scalar_select 0, %s6, %s4
  // Predicated region
  $region2: #{mask_bn_forward.3} parent=0 // pred_check
    _
  $region3: #{mask_bn_forward.3} parent=0 // pred_check_branch
    %9 = sbr.rel (0) target = $region5
  $region4: #{mask_bn_forward.3} parent=0 // pred_region
    _
  $region5: #{mask_bn_forward.3} parent=0 // pred_fallthru
    _
  // Predicated region
  $region6: #{mask_bn_forward.3} parent=0 // pred_check
    _
  $region7: #{mask_bn_forward.3} parent=0 // pred_check_branch
    %11 = sbr.rel (0) target = $region9
  $region8: #{mask_bn_forward.3} parent=0 // pred_region
    _
  $region9: #{mask_bn_forward.3} parent=0 // pred_fallthru
    _
  // Predicated region
  $region10: #{mask_bn_forward.3} parent=0 // pred_check
    _
  $region11: #{mask_bn_forward.3} parent=0 // pred_check_branch
    %13 = sbr.rel (0) target = $region13
  $region12: #{mask_bn_forward.3} parent=0 // pred_region
    _
  $region13: #{mask_bn_forward.3} parent=0 // pred_fallthru
    _
  %v14 = vld [vmem:[%s0] sm:$0xff]
  %v15 = vld [vmem:[%s0 + $0x8] sm:$0xff]
  %v16 = vld [vmem:[%s0 + $0x10] sm:$0xff]
  %v17 = vld [vmem:[%s0 + $0x18] sm:$0xff]
  %v18 = vld [vmem:[%s1] sm:$0x1]
  %v20 = vperm.slane %v18, 0
  %v22 = vmul.f32 %v14, %v20
  %v23 = vmul.f32 %v15, %v20
  %v24 = vmul.f32 %v16, %v20
  %v25 = vmul.f32 %v17, %v20
  %v26 = vld [vmem:[%s2] sm:$0x1]
  %v28 = vperm.slane %v26, 0
  %v30 = vadd.f32 %v22, %v28
  %v31 = vadd.f32 %v23, %v28
  %v32 = vadd.f32 %v24, %v28
  %v33 = vadd.f32 %v25, %v28
  %34 = vst [vmem:[%s3] sm:$0xff] %v30
  %35 = vst [vmem:[%s3 + $0x8] sm:$0xff] %v31
  %36 = vst [vmem:[%s3 + $0x10] sm:$0xff] %v32
  %37 = vst [vmem:[%s3 + $0x18] sm:$0xff] %v33
  // Predicated region
  $region14: #{mask_bn_forward.3} parent=0 // pred_check
    _
  $region15: #{mask_bn_forward.3} parent=0 // pred_check_branch
    %39 = sbr.rel (0) target = $region17
  $region16: #{mask_bn_forward.3} parent=0 // pred_region
    _
  $region17: #{mask_bn_forward.3} parent=0 // pred_fallthru
    _
  // Predicated region
  $region18: #{mask_bn_forward.3} parent=0 // pred_check
    _
  $region19: #{mask_bn_forward.3} parent=0 // pred_check_branch
    %41 = sbr.rel (0) target = $region21
  $region20: #{mask_bn_forward.3} parent=0 // pred_region
    _
  $region21: #{mask_bn_forward.3} parent=0 // pred_fallthru
    _

</llo_original>
